<compile_context>
chip_gen: v5e
topology: v5e:2x2
jax: 0.10.0
libtpu: 0.0.40
codegen_flags: <defaults>
</compile_context>

<pallas_src>
import functools

import jax
import jax.numpy as jnp
from jax.experimental import pallas as pl
from jax.experimental.pallas import tpu as pltpu


def _critic_kernel(
    obs_ref, act_ref,          # [TB, obs_dim], [TB, action_dim]
    wobs_ref, wact_ref,        # trunk Linear split: [obs_dim, H], [action_dim, H]
    tb_ref,                    # trunk bias: [1, H]
    g_ref, beta_ref,           # LayerNorm gamma/beta: [1, H]
    w1_ref, b1_ref,            # fused Q heads, layer 1: [H, 2H], [1, 2H]
    w2_ref, b2_ref,            # fused Q heads, layer 2 (block-diag): [2H, 2], [1, 2]
    out_ref,                   # [TB, 2]  (col 0 = q1, col 1 = q2)
):
    # ----- trunk: (obs @ W_obs + action @ W_act + b) -> LayerNorm -> Tanh -----
    h = (jnp.dot(obs_ref[...], wobs_ref[...], preferred_element_type=jnp.float32)
         + jnp.dot(act_ref[...], wact_ref[...], preferred_element_type=jnp.float32)
         + tb_ref[...])
    mu = jnp.mean(h, axis=-1, keepdims=True)
    var = jnp.mean((h - mu) ** 2, axis=-1, keepdims=True)
    h = (h - mu) * jax.lax.rsqrt(var + 1e-5)
    h = jnp.tanh(h * g_ref[...] + beta_ref[...])

    # ----- both Q heads in one pass: Linear -> ReLU -> Linear (block-diag) -----
    z = jnp.dot(h, w1_ref[...], preferred_element_type=jnp.float32) + b1_ref[...]
    z = jnp.maximum(z, 0.0)
    out_ref[...] = (jnp.dot(z, w2_ref[...], preferred_element_type=jnp.float32)
                    + b2_ref[...])


def pack_params(params, obs_dim):
    """One-time weight refactoring (do this once, not per forward call)."""
    H = params["trunk_w"].shape[1]
    w_obs = params["trunk_w"][:obs_dim]                                    # [obs_dim, H]
    w_act = params["trunk_w"][obs_dim:]                                    # [action_dim, H]
    w1_cat = jnp.concatenate([params["q1_w1"], params["q2_w1"]], axis=1)   # [H, 2H]
    b1_cat = jnp.concatenate([params["q1_b1"], params["q2_b1"]], axis=1)   # [1, 2H]
    zcol = jnp.zeros((H, 1), jnp.float32)
    w2_bd = jnp.concatenate(
        [jnp.concatenate([params["q1_w2"], zcol], axis=1),
         jnp.concatenate([zcol, params["q2_w2"]], axis=1)], axis=0)        # [2H, 2]
    b2_cat = jnp.concatenate([params["q1_b2"], params["q2_b2"]], axis=1)   # [1, 2]
    return dict(
        w_obs=w_obs, w_act=w_act, trunk_b=params["trunk_b"],
        ln_g=params["ln_g"], ln_b=params["ln_b"],
        w1=w1_cat, b1=b1_cat, w2=w2_bd, b2=b2_cat,
    )


@jax.jit
def critic_forward(obs, action, packed):
    """obs: [B, obs_dim], action: [B, action_dim] -> (q1 [B,1], q2 [B,1])."""
    B, obs_dim = obs.shape
    action_dim = action.shape[1]
    H = packed["w_obs"].shape[1]
    d_in = obs_dim + action_dim

    # --- batch tiling: single block for small B, 512-row tiles otherwise ---
    TB = B if B <= 512 else 512
    grid = (pl.cdiv(B, TB),)

    def row_spec(feat):
        return pl.BlockSpec((TB, feat), lambda i: (i, 0))

    def pinned(shape):
        # Same block index every iteration -> stays VMEM-resident, no re-DMA.
        return pl.BlockSpec(shape, lambda i: (0, 0))

    in_specs = [
        row_spec(obs_dim),            # obs
        row_spec(action_dim),         # action
        pinned((obs_dim, H)),         # w_obs
        pinned((action_dim, H)),      # w_act
        pinned((1, H)),               # trunk bias
        pinned((1, H)),               # ln gamma
        pinned((1, H)),               # ln beta
        pinned((H, 2 * H)),           # fused head layer-1 weight
        pinned((1, 2 * H)),           # fused head layer-1 bias
        pinned((2 * H, 2)),           # block-diag head layer-2 weight
        pinned((1, 2)),               # fused head layer-2 bias
    ]
    out_specs = pl.BlockSpec((TB, 2), lambda i: (i, 0))

    flops = 2 * B * (d_in * H + H * 2 * H + 2 * H * 2)
    bytes_accessed = 4 * (B * d_in + B * 2
                          + d_in * H + 3 * H
                          + 2 * H * H + 2 * H
                          + 2 * H * 2 + 2)
    cost = pl.CostEstimate(flops=flops, transcendentals=B * H,
                           bytes_accessed=bytes_accessed)

    q_pair = pl.pallas_call(
        _critic_kernel,
        out_shape=jax.ShapeDtypeStruct((B, 2), jnp.float32),
        grid=grid,
        in_specs=in_specs,
        out_specs=out_specs,
        compiler_params=pltpu.CompilerParams(
            dimension_semantics=("parallel",)),
        cost_estimate=cost,
    )(obs, action,
      packed["w_obs"], packed["w_act"], packed["trunk_b"],
      packed["ln_g"], packed["ln_b"],
      packed["w1"], packed["b1"], packed["w2"], packed["b2"])

    return q_pair[:, 0:1], q_pair[:, 1:2]


def init_params(key, obs_dim, action_dim, hidden_dim):
    d_in = obs_dim + action_dim
    keys = jax.random.split(key, 6)

    def lin(k, fan_in, fan_out):
        w = jax.random.normal(k, (fan_in, fan_out), jnp.float32) / jnp.sqrt(fan_in)
        b = jnp.zeros((1, fan_out), jnp.float32)
        return w, b

    trunk_w, trunk_b = lin(keys[0], d_in, hidden_dim)
    q1_w1, q1_b1 = lin(keys[1], hidden_dim, hidden_dim)
    q1_w2, q1_b2 = lin(keys[2], hidden_dim, 1)
    q2_w1, q2_b1 = lin(keys[3], hidden_dim, hidden_dim)
    q2_w2, q2_b2 = lin(keys[4], hidden_dim, 1)

    return dict(
        trunk_w=trunk_w, trunk_b=trunk_b,
        ln_g=jnp.ones((1, hidden_dim), jnp.float32),
        ln_b=jnp.zeros((1, hidden_dim), jnp.float32),
        q1_w1=q1_w1, q1_b1=q1_b1, q1_w2=q1_w2, q1_b2=q1_b2,
        q2_w1=q2_w1, q2_b1=q2_b1, q2_w2=q2_w2, q2_b2=q2_b2,
    )


def _reference(obs, action, p):
    x = jnp.concatenate([obs, action], axis=-1)
    h = x @ p["trunk_w"] + p["trunk_b"]
    mu = h.mean(-1, keepdims=True)
    var = ((h - mu) ** 2).mean(-1, keepdims=True)
    h = (h - mu) / jnp.sqrt(var + 1e-5) * p["ln_g"] + p["ln_b"]
    h = jnp.tanh(h)

    def q(h, w1, b1, w2, b2):
        return jnp.maximum(h @ w1 + b1, 0.0) @ w2 + b2

    return (q(h, p["q1_w1"], p["q1_b1"], p["q1_w2"], p["q1_b2"]),
            q(h, p["q2_w1"], p["q2_b1"], p["q2_w2"], p["q2_b2"]))


if __name__ == "__main__":
    obs_dim, action_dim, hidden_dim, batch = 24, 6, 32, 8

    key = jax.random.PRNGKey(0)
    k_obs, k_act, k_par = jax.random.split(key, 3)
    obs = jax.random.normal(k_obs, (batch, obs_dim), jnp.float32)
    action = jax.random.normal(k_act, (batch, action_dim), jnp.float32)
    params = init_params(k_par, obs_dim, action_dim, hidden_dim)

    packed = pack_params(params, obs_dim)
    q1, q2 = critic_forward(obs, action, packed)
    jax.block_until_ready((q1, q2))

    r1, r2 = _reference(obs, action, params)
    assert q1.shape == (batch, 1) and q2.shape == (batch, 1)
    assert jnp.allclose(q1, r1, atol=1e-4), "q1 mismatch"
    assert jnp.allclose(q2, r2, atol=1e-4), "q2 mismatch"

    print("KERNEL_OK")
</pallas_src>

<mosaic_0001>
module attributes {stable_mosaic.version = 11 : i64} {
  func.func @_critic_kernel(%arg0: i32, %arg1: memref<8x24xf32, #tpu.memory_space<vmem>>, %arg2: memref<8x6xf32, #tpu.memory_space<vmem>>, %arg3: memref<24x32xf32, #tpu.memory_space<vmem>>, %arg4: memref<6x32xf32, #tpu.memory_space<vmem>>, %arg5: memref<1x32xf32, #tpu.memory_space<vmem>>, %arg6: memref<1x32xf32, #tpu.memory_space<vmem>>, %arg7: memref<1x32xf32, #tpu.memory_space<vmem>>, %arg8: memref<32x64xf32, #tpu.memory_space<vmem>>, %arg9: memref<1x64xf32, #tpu.memory_space<vmem>>, %arg10: memref<64x2xf32, #tpu.memory_space<vmem>>, %arg11: memref<1x2xf32, #tpu.memory_space<vmem>>, %arg12: memref<8x2xf32, #tpu.memory_space<vmem>>) attributes {dimension_semantics = [#tpu.dimension_semantics<parallel>], iteration_bounds = array<i64: 1>, scalar_prefetch = 0 : i64, scratch_operands = 0 : i64, tpu.core_type = #tpu.core_type<tc>, window_params = [{transform_indices = @transform_0, window_bounds = array<i64: 8, 24>}, {transform_indices = @transform_1, window_bounds = array<i64: 8, 6>}, {pipeline_mode = #tpu.pipeline_mode<synchronous>, transform_indices = @transform_2, window_bounds = array<i64: 24, 32>}, {pipeline_mode = #tpu.pipeline_mode<synchronous>, transform_indices = @transform_3, window_bounds = array<i64: 6, 32>}, {pipeline_mode = #tpu.pipeline_mode<synchronous>, transform_indices = @transform_4, window_bounds = array<i64: 1, 32>}, {pipeline_mode = #tpu.pipeline_mode<synchronous>, transform_indices = @transform_5, window_bounds = array<i64: 1, 32>}, {pipeline_mode = #tpu.pipeline_mode<synchronous>, transform_indices = @transform_6, window_bounds = array<i64: 1, 32>}, {pipeline_mode = #tpu.pipeline_mode<synchronous>, transform_indices = @transform_7, window_bounds = array<i64: 32, 64>}, {pipeline_mode = #tpu.pipeline_mode<synchronous>, transform_indices = @transform_8, window_bounds = array<i64: 1, 64>}, {pipeline_mode = #tpu.pipeline_mode<synchronous>, transform_indices = @transform_9, window_bounds = array<i64: 64, 2>}, {pipeline_mode = #tpu.pipeline_mode<synchronous>, transform_indices = @transform_10, window_bounds = array<i64: 1, 2>}, {transform_indices = @transform_11, window_bounds = array<i64: 8, 2>}]} {
    %c0 = arith.constant 0 : index
    %c0_0 = arith.constant 0 : index
    %0 = vector.load %arg1[%c0, %c0_0] : memref<8x24xf32, #tpu.memory_space<vmem>>, vector<8x24xf32>
    %c0_1 = arith.constant 0 : index
    %c0_2 = arith.constant 0 : index
    %1 = vector.load %arg3[%c0_1, %c0_2] : memref<24x32xf32, #tpu.memory_space<vmem>>, vector<24x32xf32>
    %cst = arith.constant dense<0.000000e+00> : vector<8x32xf32>
    %2 = tpu.matmul %0, %1, %cst {dimension_numbers = #tpu.dot_dimension_numbers<[1], [0], [0], [1], [0, 0, 1, 1], [], []>} : vector<8x24xf32>, vector<24x32xf32>, vector<8x32xf32> -> vector<8x32xf32>
    %c0_3 = arith.constant 0 : index
    %c0_4 = arith.constant 0 : index
    %3 = vector.load %arg2[%c0_3, %c0_4] : memref<8x6xf32, #tpu.memory_space<vmem>>, vector<8x6xf32>
    %c0_5 = arith.constant 0 : index
    %c0_6 = arith.constant 0 : index
    %4 = vector.load %arg4[%c0_5, %c0_6] : memref<6x32xf32, #tpu.memory_space<vmem>>, vector<6x32xf32>
    %cst_7 = arith.constant dense<0.000000e+00> : vector<8x32xf32>
    %5 = tpu.matmul %3, %4, %cst_7 {dimension_numbers = #tpu.dot_dimension_numbers<[1], [0], [0], [1], [0, 0, 1, 1], [], []>} : vector<8x6xf32>, vector<6x32xf32>, vector<8x32xf32> -> vector<8x32xf32>
    %6 = arith.addf %2, %5 : vector<8x32xf32>
    %c0_8 = arith.constant 0 : index
    %c0_9 = arith.constant 0 : index
    %7 = vector.load %arg5[%c0_8, %c0_9] : memref<1x32xf32, #tpu.memory_space<vmem>>, vector<1x32xf32>
    %8 = vector.broadcast %7 : vector<1x32xf32> to vector<8x32xf32>
    %9 = arith.addf %6, %8 : vector<8x32xf32>
    %cst_10 = arith.constant dense<0.000000e+00> : vector<8xf32>
    %10 = vector.multi_reduction <add>, %9, %cst_10 [1] : vector<8x32xf32> to vector<8xf32>
    %11 = vector.shape_cast %10 : vector<8xf32> to vector<8x1xf32>
    %cst_11 = arith.constant 3.200000e+01 : f32
    %12 = vector.broadcast %cst_11 : f32 to vector<8x1xf32>
    %13 = arith.divf %11, %12 : vector<8x1xf32>
    %14 = vector.broadcast %13 : vector<8x1xf32> to vector<8x32xf32>
    %15 = arith.subf %9, %14 : vector<8x32xf32>
    %16 = arith.mulf %15, %15 : vector<8x32xf32>
    %cst_12 = arith.constant dense<0.000000e+00> : vector<8xf32>
    %17 = vector.multi_reduction <add>, %16, %cst_12 [1] : vector<8x32xf32> to vector<8xf32>
    %18 = vector.shape_cast %17 : vector<8xf32> to vector<8x1xf32>
    %cst_13 = arith.constant 3.200000e+01 : f32
    %19 = vector.broadcast %cst_13 : f32 to vector<8x1xf32>
    %20 = arith.divf %18, %19 : vector<8x1xf32>
    %21 = vector.broadcast %13 : vector<8x1xf32> to vector<8x32xf32>
    %22 = arith.subf %9, %21 : vector<8x32xf32>
    %cst_14 = arith.constant 9.99999974E-6 : f32
    %23 = vector.broadcast %cst_14 : f32 to vector<8x1xf32>
    %24 = arith.addf %20, %23 : vector<8x1xf32>
    %25 = math.rsqrt %24 : vector<8x1xf32>
    %26 = vector.broadcast %25 : vector<8x1xf32> to vector<8x32xf32>
    %27 = arith.mulf %22, %26 : vector<8x32xf32>
    %c0_15 = arith.constant 0 : index
    %c0_16 = arith.constant 0 : index
    %28 = vector.load %arg6[%c0_15, %c0_16] : memref<1x32xf32, #tpu.memory_space<vmem>>, vector<1x32xf32>
    %29 = vector.broadcast %28 : vector<1x32xf32> to vector<8x32xf32>
    %30 = arith.mulf %27, %29 : vector<8x32xf32>
    %c0_17 = arith.constant 0 : index
    %c0_18 = arith.constant 0 : index
    %31 = vector.load %arg7[%c0_17, %c0_18] : memref<1x32xf32, #tpu.memory_space<vmem>>, vector<1x32xf32>
    %32 = vector.broadcast %31 : vector<1x32xf32> to vector<8x32xf32>
    %33 = arith.addf %30, %32 : vector<8x32xf32>
    %34 = math.tanh %33 : vector<8x32xf32>
    %c0_19 = arith.constant 0 : index
    %c0_20 = arith.constant 0 : index
    %35 = vector.load %arg8[%c0_19, %c0_20] : memref<32x64xf32, #tpu.memory_space<vmem>>, vector<32x64xf32>
    %cst_21 = arith.constant dense<0.000000e+00> : vector<8x64xf32>
    %36 = tpu.matmul %34, %35, %cst_21 {dimension_numbers = #tpu.dot_dimension_numbers<[1], [0], [0], [1], [0, 0, 1, 1], [], []>} : vector<8x32xf32>, vector<32x64xf32>, vector<8x64xf32> -> vector<8x64xf32>
    %c0_22 = arith.constant 0 : index
    %c0_23 = arith.constant 0 : index
    %37 = vector.load %arg9[%c0_22, %c0_23] : memref<1x64xf32, #tpu.memory_space<vmem>>, vector<1x64xf32>
    %38 = vector.broadcast %37 : vector<1x64xf32> to vector<8x64xf32>
    %39 = arith.addf %36, %38 : vector<8x64xf32>
    %cst_24 = arith.constant 0.000000e+00 : f32
    %40 = vector.broadcast %cst_24 : f32 to vector<8x64xf32>
    %41 = arith.maximumf %39, %40 : vector<8x64xf32>
    %c0_25 = arith.constant 0 : index
    %c0_26 = arith.constant 0 : index
    %42 = vector.load %arg10[%c0_25, %c0_26] : memref<64x2xf32, #tpu.memory_space<vmem>>, vector<64x2xf32>
    %cst_27 = arith.constant dense<0.000000e+00> : vector<8x2xf32>
    %43 = tpu.matmul %41, %42, %cst_27 {dimension_numbers = #tpu.dot_dimension_numbers<[1], [0], [0], [1], [0, 0, 1, 1], [], []>} : vector<8x64xf32>, vector<64x2xf32>, vector<8x2xf32> -> vector<8x2xf32>
    %c0_28 = arith.constant 0 : index
    %c0_29 = arith.constant 0 : index
    %44 = vector.load %arg11[%c0_28, %c0_29] : memref<1x2xf32, #tpu.memory_space<vmem>>, vector<1x2xf32>
    %45 = vector.broadcast %44 : vector<1x2xf32> to vector<8x2xf32>
    %46 = arith.addf %43, %45 : vector<8x2xf32>
    %c0_30 = arith.constant 0 : index
    %c0_31 = arith.constant 0 : index
    %47 = vector.load %arg12[%c0_30, %c0_31] : memref<8x2xf32, #tpu.memory_space<vmem>>, vector<8x2xf32>
    tpu.vector_store %arg12[%c0_30, %c0_31], %46 {strides = array<i32>} : memref<8x2xf32, #tpu.memory_space<vmem>>, vector<8x2xf32>,
    return
  }
  func.func @transform_0(%arg0: i32) -> (i32, i32) {
    %c0_i32 = arith.constant 0 : i32
    %c0_i32_0 = arith.constant 0 : i32
    return %arg0, %c0_i32 : i32, i32
  }
  func.func @transform_1(%arg0: i32) -> (i32, i32) {
    %c0_i32 = arith.constant 0 : i32
    %c0_i32_0 = arith.constant 0 : i32
    return %arg0, %c0_i32 : i32, i32
  }
  func.func @transform_2(%arg0: i32) -> (i32, i32) {
    %c0_i32 = arith.constant 0 : i32
    %c0_i32_0 = arith.constant 0 : i32
    %c0_i32_1 = arith.constant 0 : i32
    return %c0_i32, %c0_i32_0 : i32, i32
  }
  func.func @transform_3(%arg0: i32) -> (i32, i32) {
    %c0_i32 = arith.constant 0 : i32
    %c0_i32_0 = arith.constant 0 : i32
    %c0_i32_1 = arith.constant 0 : i32
    return %c0_i32, %c0_i32_0 : i32, i32
  }
  func.func @transform_4(%arg0: i32) -> (i32, i32) {
    %c0_i32 = arith.constant 0 : i32
    %c0_i32_0 = arith.constant 0 : i32
    %c0_i32_1 = arith.constant 0 : i32
    return %c0_i32, %c0_i32_0 : i32, i32
  }
  func.func @transform_5(%arg0: i32) -> (i32, i32) {
    %c0_i32 = arith.constant 0 : i32
    %c0_i32_0 = arith.constant 0 : i32
    %c0_i32_1 = arith.constant 0 : i32
    return %c0_i32, %c0_i32_0 : i32, i32
  }
  func.func @transform_6(%arg0: i32) -> (i32, i32) {
    %c0_i32 = arith.constant 0 : i32
    %c0_i32_0 = arith.constant 0 : i32
    %c0_i32_1 = arith.constant 0 : i32
    return %c0_i32, %c0_i32_0 : i32, i32
  }
  func.func @transform_7(%arg0: i32) -> (i32, i32) {
    %c0_i32 = arith.constant 0 : i32
    %c0_i32_0 = arith.constant 0 : i32
    %c0_i32_1 = arith.constant 0 : i32
    return %c0_i32, %c0_i32_0 : i32, i32
  }
  func.func @transform_8(%arg0: i32) -> (i32, i32) {
    %c0_i32 = arith.constant 0 : i32
    %c0_i32_0 = arith.constant 0 : i32
    %c0_i32_1 = arith.constant 0 : i32
    return %c0_i32, %c0_i32_0 : i32, i32
  }
  func.func @transform_9(%arg0: i32) -> (i32, i32) {
    %c0_i32 = arith.constant 0 : i32
    %c0_i32_0 = arith.constant 0 : i32
    %c0_i32_1 = arith.constant 0 : i32
    return %c0_i32, %c0_i32_0 : i32, i32
  }
  func.func @transform_10(%arg0: i32) -> (i32, i32) {
    %c0_i32 = arith.constant 0 : i32
    %c0_i32_0 = arith.constant 0 : i32
    %c0_i32_1 = arith.constant 0 : i32
    return %c0_i32, %c0_i32_0 : i32, i32
  }
  func.func @transform_11(%arg0: i32) -> (i32, i32) {
    %c0_i32 = arith.constant 0 : i32
    %c0_i32_0 = arith.constant 0 : i32
    return %arg0, %c0_i32 : i32, i32
  }
}

</mosaic_0001>

<llo_original>
// kernel: critic_forward.1
$region0: #{critic_forward.1}
  #allocation0 [shape = 'u32[]', space=smem, size = 0x4, offset = 0x4, fixed_abs, tag = 'smem constant byte address 0x4 - core index']
  #allocation1 [shape = 'u32[72,128]{1,0:T(1,128)}', space=vmem, size = 0x9000, scoped, tag = 'internal scratch']
  %s0 = inlined_call_operand.vmem [shape: f32[8,24], index: 0, kind: input, shape index: {}]
  %s1 = inlined_call_operand.hbm [shape: f32[8,6], index: 1, kind: input, shape index: {}]
  %s2 = inlined_call_operand.vmem [shape: f32[24,32], index: 2, kind: input, shape index: {}]
  %s3 = inlined_call_operand.vmem [shape: f32[6,32], index: 3, kind: input, shape index: {}]
  %s4 = inlined_call_operand.hbm [shape: f32[1,32], index: 4, kind: input, shape index: {}]
  %s5 = inlined_call_operand.hbm [shape: f32[1,32], index: 5, kind: input, shape index: {}]
  %s6 = inlined_call_operand.hbm [shape: f32[1,32], index: 6, kind: input, shape index: {}]
  %s7 = inlined_call_operand.vmem [shape: f32[32,64], index: 7, kind: input, shape index: {}]
  %s8 = inlined_call_operand.hbm [shape: f32[1,64], index: 8, kind: input, shape index: {}]
  %s9 = inlined_call_operand.vmem [shape: f32[64,2], index: 9, kind: input, shape index: {}]
  %s10 = inlined_call_operand.hbm [shape: f32[1,2], index: 10, kind: input, shape index: {}]
  %s11 = inlined_call_operand.vmem [shape: f32[8,2], index: 11, kind: output, shape index: {}]
  %s12 = sld [smem:[#allocation0]]
  $region78: #{critic_forward.1} parent=0
    _
  %s14 = ssub.s32 1, %s12
  %s15 = scalar_select 0, %s14, %s12
  $region1: #{critic_forward.1} parent=0
    #allocation2 [shape = 'u8[4096]{0}', space=vmem, size = 0x1000, scoped, tag = 'input window, operand 1, single buffered']
    #allocation3 [shape = 's32[1]{0}', space=sflag, size = 0x4, scoped, tag = 'scoped memory for critic_forward.1']
    #allocation4 [shape = 'u8[512]{0}', space=vmem, size = 0x400, scoped, tag = 'input window, operand 4, single buffered']
    #allocation5 [shape = 's32[1]{0}', space=sflag, size = 0x4, scoped, tag = 'scoped memory for critic_forward.1']
    #allocation6 [shape = 'u8[512]{0}', space=vmem, size = 0x400, scoped, tag = 'input window, operand 5, single buffered']
    #allocation7 [shape = 'u8[512]{0}', space=vmem, size = 0x400, scoped, tag = 'input window, operand 6, single buffered']
    #allocation8 [shape = 's32[1]{0}', space=sflag, size = 0x4, scoped, tag = 'scoped memory for critic_forward.1']
    #allocation9 [shape = 'u8[512]{0}', space=vmem, size = 0x400, scoped, tag = 'input window, operand 8, single buffered']
    #allocation10 [shape = 'u8[512]{0}', space=vmem, size = 0x400, scoped, tag = 'input window, operand 10, single buffered']
    #allocation11 [shape = 's32[1]{0}', space=sflag, size = 0x4, scoped, tag = 'scoped memory for critic_forward.1']
    %16 = vsyncpa [#allocation3], 0
    %17 = vsyncpa [#allocation5], 0
    %18 = vsyncpa [#allocation8], 0
    %19 = vsyncpa [#allocation11], 0
    // Predicated region
    $region2: #{critic_forward.1} parent=1 // pred_check
      _
    $region3: #{critic_forward.1} parent=1 // pred_check_branch
      %21 = sbr.rel (0) target = $region5
    $region4: #{critic_forward.1} parent=1 // pred_region
      _
    $region5: #{critic_forward.1} parent=1 // pred_fallthru
      _
    // Predicated region
    $region6: #{critic_forward.1} parent=1 // pred_check
      _
    $region7: #{critic_forward.1} parent=1 // pred_check_branch
      %23 = sbr.rel (0) target = $region9
    $region8: #{critic_forward.1} parent=1 // pred_region
      %25 = vsyncadd [#allocation3], 0
      %s27 = sshll.u32 %s1, 4
      %s28 = int_to_ptr.hbm [resolvable:$true] %s27
      %s29 = sshll.u32 [#allocation2], 4
      %s30 = int_to_ptr.vmem [resolvable:$true] %s29
      %32 = dma.hbm_to_vmem [thread:$0]  %s28, 128, %s30, [#allocation3]
    $region9: #{critic_forward.1} parent=1 // pred_fallthru
      _
    // Predicated region
    $region10: #{critic_forward.1} parent=1 // pred_check
      _
    $region11: #{critic_forward.1} parent=1 // pred_check_branch
      %34 = sbr.rel (0) target = $region13
    $region12: #{critic_forward.1} parent=1 // pred_region
      _
    $region13: #{critic_forward.1} parent=1 // pred_fallthru
      _
    // Predicated region
    $region14: #{critic_forward.1} parent=1 // pred_check
      _
    $region15: #{critic_forward.1} parent=1 // pred_check_branch
      %36 = sbr.rel (0) target = $region17
    $region16: #{critic_forward.1} parent=1 // pred_region
      _
    $region17: #{critic_forward.1} parent=1 // pred_fallthru
      _
    // Predicated region
    $region18: #{critic_forward.1} parent=1 // pred_check
      _
    $region19: #{critic_forward.1} parent=1 // pred_check_branch
      %38 = sbr.rel (0) target = $region21
    $region20: #{critic_forward.1} parent=1 // pred_region
      %40 = vsyncadd [#allocation5], 0
      %s42 = sshll.u32 %s4, 4
      %s43 = int_to_ptr.hbm [resolvable:$true] %s42
      %s44 = sshll.u32 [#allocation4], 4
      %s45 = int_to_ptr.vmem [resolvable:$true] %s44
      %47 = dma.hbm_to_vmem [thread:$0]  %s43, 16, %s45, [#allocation5]
    $region21: #{critic_forward.1} parent=1 // pred_fallthru
      _
    // Predicated region
    $region22: #{critic_forward.1} parent=1 // pred_check
      _
    $region23: #{critic_forward.1} parent=1 // pred_check_branch
      %49 = sbr.rel (0) target = $region25
    $region24: #{critic_forward.1} parent=1 // pred_region
      %51 = vsyncadd [#allocation5], 0
      %s53 = sshll.u32 %s5, 4
      %s54 = int_to_ptr.hbm [resolvable:$true] %s53
      %s55 = sshll.u32 [#allocation6], 4
      %s56 = int_to_ptr.vmem [resolvable:$true] %s55
      %58 = dma.hbm_to_vmem [thread:$0]  %s54, 16, %s56, [#allocation5]
    $region25: #{critic_forward.1} parent=1 // pred_fallthru
      _
    // Predicated region
    $region26: #{critic_forward.1} parent=1 // pred_check
      _
    $region27: #{critic_forward.1} parent=1 // pred_check_branch
      %60 = sbr.rel (0) target = $region29
    $region28: #{critic_forward.1} parent=1 // pred_region
      %62 = vsyncadd [#allocation8], 0
      %s64 = sshll.u32 %s6, 4
      %s65 = int_to_ptr.hbm [resolvable:$true] %s64
      %s66 = sshll.u32 [#allocation7], 4
      %s67 = int_to_ptr.vmem [resolvable:$true] %s66
      %69 = dma.hbm_to_vmem [thread:$0]  %s65, 16, %s67, [#allocation8]
    $region29: #{critic_forward.1} parent=1 // pred_fallthru
      _
    // Predicated region
    $region30: #{critic_forward.1} parent=1 // pred_check
      _
    $region31: #{critic_forward.1} parent=1 // pred_check_branch
      %71 = sbr.rel (0) target = $region33
    $region32: #{critic_forward.1} parent=1 // pred_region
      _
    $region33: #{critic_forward.1} parent=1 // pred_fallthru
      _
    // Predicated region
    $region34: #{critic_forward.1} parent=1 // pred_check
      _
    $region35: #{critic_forward.1} parent=1 // pred_check_branch
      %73 = sbr.rel (0) target = $region37
    $region36: #{critic_forward.1} parent=1 // pred_region
      %75 = vsyncadd [#allocation8], 0
      %s77 = sshll.u32 %s8, 4
      %s78 = int_to_ptr.hbm [resolvable:$true] %s77
      %s79 = sshll.u32 [#allocation9], 4
      %s80 = int_to_ptr.vmem [resolvable:$true] %s79
      %82 = dma.hbm_to_vmem [thread:$0]  %s78, 16, %s80, [#allocation8]
    $region37: #{critic_forward.1} parent=1 // pred_fallthru
      _
    // Predicated region
    $region38: #{critic_forward.1} parent=1 // pred_check
      _
    $region39: #{critic_forward.1} parent=1 // pred_check_branch
      %84 = sbr.rel (0) target = $region41
    $region40: #{critic_forward.1} parent=1 // pred_region
      _
    $region41: #{critic_forward.1} parent=1 // pred_fallthru
      _
    // Predicated region
    $region42: #{critic_forward.1} parent=1 // pred_check
      _
    $region43: #{critic_forward.1} parent=1 // pred_check_branch
      %86 = sbr.rel (0) target = $region45
    $region44: #{critic_forward.1} parent=1 // pred_region
      %88 = vsyncadd [#allocation11], 0
      %s90 = sshll.u32 %s10, 4
      %s91 = int_to_ptr.hbm [resolvable:$true] %s90
      %s92 = sshll.u32 [#allocation10], 4
      %s93 = int_to_ptr.vmem [resolvable:$true] %s92
      %95 = dma.hbm_to_vmem [thread:$0]  %s91, 16, %s93, [#allocation11]
    $region45: #{critic_forward.1} parent=1 // pred_fallthru
      _
    // Predicated region
    $region46: #{critic_forward.1} parent=1 // pred_check
      _
    $region47: #{critic_forward.1} parent=1 // pred_check_branch
      %97 = sbr.rel (0) target = $region49
    $region48: #{critic_forward.1} parent=1 // pred_region
      %99 = dma.done [#allocation3], 128
    $region49: #{critic_forward.1} parent=1 // pred_fallthru
      _
    // Predicated region
    $region50: #{critic_forward.1} parent=1 // pred_check
      _
    $region51: #{critic_forward.1} parent=1 // pred_check_branch
      %101 = sbr.rel (0) target = $region53
    $region52: #{critic_forward.1} parent=1 // pred_region
      %103 = dma.done [#allocation5], 16
    $region53: #{critic_forward.1} parent=1 // pred_fallthru
      _
    // Predicated region
    $region54: #{critic_forward.1} parent=1 // pred_check
      _
    $region55: #{critic_forward.1} parent=1 // pred_check_branch
      %105 = sbr.rel (0) target = $region57
    $region56: #{critic_forward.1} parent=1 // pred_region
      %107 = dma.done [#allocation5], 16
    $region57: #{critic_forward.1} parent=1 // pred_fallthru
      _
    // Predicated region
    $region58: #{critic_forward.1} parent=1 // pred_check
      _
    $region59: #{critic_forward.1} parent=1 // pred_check_branch
      %109 = sbr.rel (0) target = $region61
    $region60: #{critic_forward.1} parent=1 // pred_region
      %111 = dma.done [#allocation8], 16
    $region61: #{critic_forward.1} parent=1 // pred_fallthru
      _
    // Predicated region
    $region62: #{critic_forward.1} parent=1 // pred_check
      _
    $region63: #{critic_forward.1} parent=1 // pred_check_branch
      %113 = sbr.rel (0) target = $region65
    $region64: #{critic_forward.1} parent=1 // pred_region
      %115 = dma.done [#allocation8], 16
    $region65: #{critic_forward.1} parent=1 // pred_fallthru
      _
    // Predicated region
    $region66: #{critic_forward.1} parent=1 // pred_check
      _
    $region67: #{critic_forward.1} parent=1 // pred_check_branch
      %117 = sbr.rel (0) target = $region69
    $region68: #{critic_forward.1} parent=1 // pred_region
      %119 = dma.done [#allocation11], 16
    $region69: #{critic_forward.1} parent=1 // pred_fallthru
      _
    %v120 = vld [vmem:[%s0] sm:$0xff]
    %v121 = vld [vmem:[%s2] sm:$0xff]
    %v122 = vld [vmem:[%s2 + $0x8] sm:$0xff]
    %v123 = vld [vmem:[%s2 + $0x10] sm:$0xff]
    %v124 = vld [vmem:[#allocation2] sm:$0xff]
    %v125 = vld [vmem:[%s3] sm:$0x3f]
    %vm126 = vcmask 48128
    %v128 = vsel %vm126, %v124, 0
    %vm130 = vcmask 1045504
    %v132 = vsel %vm130, %v125, 0
    %134 = vmatpush.msra.mxu0 0.0
    %135 = vmatpush.msra.mxu0 0.0
    %136 = vmatpush.msra.mxu0 0.0
    %137 = vmatpush.msra.mxu0 0.0
    %138 = vmatpush.msra.mxu0 0.0
    %139 = vmatpush.msra.mxu0 0.0
    %140 = vmatpush.msra.mxu0 0.0
    %141 = vmatpush.msra.mxu0 0.0
    %142 = vmatpush.msra.mxu0 0.0
    %143 = vmatpush.msra.mxu0 0.0
    %144 = vmatpush.msra.mxu0 0.0
    %145 = vmatpush.msra.mxu0 0.0
    %146 = vmatpush.msra.mxu0 0.0
    %147 = vmatpush.msra.mxu0 0.0
    %148 = vmatpush.msra.mxu0 0.0
    %149 = vmatpush.msra.mxu0 %v132
    %150 = vmatmul.f32.gmra.mxu0 %v128
    %v151 = vpop.f32.mrf.mxu0
    %v152 = vadd.f32 0.0, %v151
    %153 = vdwg.mxu0
    %vm154 = vcmask 195584
    %v156 = vsel %vm154, %v120, 0
    %158 = vmatpush.msra.mxu0 0.0
    %159 = vmatpush.msra.mxu0 0.0
    %160 = vmatpush.msra.mxu0 0.0
    %161 = vmatpush.msra.mxu0 0.0
    %162 = vmatpush.msra.mxu0 0.0
    %163 = vmatpush.msra.mxu0 0.0
    %164 = vmatpush.msra.mxu0 0.0
    %165 = vmatpush.msra.mxu0 0.0
    %166 = vmatpush.msra.mxu0 0.0
    %167 = vmatpush.msra.mxu0 0.0
    %168 = vmatpush.msra.mxu0 0.0
    %169 = vmatpush.msra.mxu0 0.0
    %170 = vmatpush.msra.mxu0 0.0
    %171 = vmatpush.msra.mxu0 %v123
    %172 = vmatpush.msra.mxu0 %v122
    %173 = vmatpush.msra.mxu0 %v121
    %174 = vmatmul.f32.gmra.mxu0 %v156
    %v175 = vpop.f32.mrf.mxu0
    %v176 = vadd.f32 %v152, %v175
    %177 = vdwg.mxu0
    %v178 = vld [vmem:[#allocation4] sm:$0x1]
    %v180 = vperm.slane %v178, 0
    %v182 = vadd.f32 %v176, %v180
    %vm183 = vcmask 261120
    %v184 = vsel %vm183, %v182, 0.0
    %185 = vadd.xlane.f32.xlu0 %v184
    %v186 = vpop.xlane.xlu0 %185
    %v187 = vrcp.pop 32.0
    %v188 = vmul.f32 32.0, %v187
    %v189 = vsub.f32 1.0, %v188
    %v190 = vmul.f32 %v187, %v189
    %v191 = vadd.f32 %v187, %v190
    %vm192 = vweird.f32 %v187
    %v193 = vsel %vm192, %v187, %v191
    %v194 = vmul.f32 %v186, %v193
    %v195 = vsub.f32 %v182, %v194
    %v196 = vmul.f32 %v195, %v195
    %v197 = vsel %vm183, %v196, 0.0
    %198 = vadd.xlane.f32.xlu0 %v197
    %v199 = vpop.xlane.xlu0 %198
    %v200 = vmul.f32 %v199, %v193
    %v201 = vadd.f32 %v200, 1e-05
    %v202 = vrsqrt.pop %v201
    %v203 = vmul.f32 %v202, %v201
    %v204 = vmul.f32 %v203, %v202
    %v205 = vmul.f32 0.5, %v204
    %v206 = vsub.f32 1.5, %v205
    %v207 = vmul.f32 %v202, %v206
    %vm208 = vweird.f32 %v201
    %vm209 = vweird.f32 %v202
    %vm210 = vmor %vm208, %vm209
    %v211 = vsel %vm210, %v202, %v207
    %v212 = vmul.f32 %v195, %v211
    %v213 = vld [vmem:[#allocation6] sm:$0x1]
    %v215 = vperm.slane %v213, 0
    %v217 = vmul.f32 %v212, %v215
    %v218 = vld [vmem:[#allocation7] sm:$0x1]
    %v220 = vperm.slane %v218, 0
    %v222 = vadd.f32 %v217, %v220
    %v223 = vtanh.pop %v222
    %v224 = vld [vmem:[%s7] sm:$0xff]
    %v225 = vld [vmem:[%s7 + $0x8] sm:$0xff]
    %v226 = vld [vmem:[%s7 + $0x10] sm:$0xff]
    %v227 = vld [vmem:[%s7 + $0x18] sm:$0xff]
    %v228 = vld [vmem:[#allocation9] sm:$0x1]
    %v230 = vperm.slane %v228, 0
    %v233 = vsel %vm183, %v223, 0
    %235 = vmatpush.msra.mxu0 0.0
    %236 = vmatpush.msra.mxu0 0.0
    %237 = vmatpush.msra.mxu0 0.0
    %238 = vmatpush.msra.mxu0 0.0
    %239 = vmatpush.msra.mxu0 0.0
    %240 = vmatpush.msra.mxu0 0.0
    %241 = vmatpush.msra.mxu0 0.0
    %242 = vmatpush.msra.mxu0 0.0
    %243 = vmatpush.msra.mxu0 0.0
    %244 = vmatpush.msra.mxu0 0.0
    %245 = vmatpush.msra.mxu0 0.0
    %246 = vmatpush.msra.mxu0 0.0
    %247 = vmatpush.msra.mxu0 %v227
    %248 = vmatpush.msra.mxu0 %v226
    %249 = vmatpush.msra.mxu0 %v225
    %250 = vmatpush.msra.mxu0 %v224
    %251 = vmatmul.f32.gmra.mxu0 %v233
    %v252 = vpop.f32.mrf.mxu0
    %v253 = vadd.f32 %v230, %v252
    %254 = vdwg.mxu0
    %v255 = vmax.f32 %v253, 0.0
    %v256 = vld [vmem:[%s9] sm:$0xff]
    %v257 = vld [vmem:[%s9 + $0x8] sm:$0xff]
    %v258 = vld [vmem:[%s9 + $0x10] sm:$0xff]
    %v259 = vld [vmem:[%s9 + $0x18] sm:$0xff]
    %v260 = vld [vmem:[%s9 + $0x20] sm:$0xff]
    %v261 = vld [vmem:[%s9 + $0x28] sm:$0xff]
    %v262 = vld [vmem:[%s9 + $0x30] sm:$0xff]
    %v263 = vld [vmem:[%s9 + $0x38] sm:$0xff]
    %v264 = vld [vmem:[#allocation10] sm:$0x1]
    %v266 = vperm.slane %v264, 0
    %vm268 = vcmask 523264
    %v270 = vsel %vm268, %v255, 0
    %272 = vmatpush.msra.mxu0 0.0
    %273 = vmatpush.msra.mxu0 0.0
    %274 = vmatpush.msra.mxu0 0.0
    %275 = vmatpush.msra.mxu0 0.0
    %276 = vmatpush.msra.mxu0 0.0
    %277 = vmatpush.msra.mxu0 0.0
    %278 = vmatpush.msra.mxu0 0.0
    %279 = vmatpush.msra.mxu0 0.0
    %280 = vmatpush.msra.mxu0 %v263
    %281 = vmatpush.msra.mxu0 %v262
    %282 = vmatpush.msra.mxu0 %v261
    %283 = vmatpush.msra.mxu0 %v260
    %284 = vmatpush.msra.mxu0 %v259
    %285 = vmatpush.msra.mxu0 %v258
    %286 = vmatpush.msra.mxu0 %v257
    %287 = vmatpush.msra.mxu0 %v256
    %288 = vmatmul.f32.gmra.mxu0 %v270
    %v289 = vpop.f32.mrf.mxu0
    %v290 = vadd.f32 %v266, %v289
    %291 = vdwg.mxu0
    %vm292 = vcmask 15360
    %293 = vst.msk [vmem:[%s11] sm:$0xff] %vm292, %v290
    // Predicated region
    $region70: #{critic_forward.1} parent=1 // pred_check
      _
    $region71: #{critic_forward.1} parent=1 // pred_check_branch
      %295 = sbr.rel (0) target = $region73
    $region72: #{critic_forward.1} parent=1 // pred_region
      _
    $region73: #{critic_forward.1} parent=1 // pred_fallthru
      _
    // Predicated region
    $region74: #{critic_forward.1} parent=1 // pred_check
      _
    $region75: #{critic_forward.1} parent=1 // pred_check_branch
      %297 = sbr.rel (0) target = $region77
    $region76: #{critic_forward.1} parent=1 // pred_region
      _
    $region77: #{critic_forward.1} parent=1 // pred_fallthru
      _
    %298 = vsyncpa [#allocation3], 1
    %299 = vsyncpa [#allocation5], 1
    %300 = vsyncpa [#allocation8], 1
    %301 = vsyncpa [#allocation11], 1

</llo_original>
